<compile_context>
chip_gen: v7x
topology: tpu7x:2x2x1
jax: 0.10.0
libtpu: 0.0.40
codegen_flags: <defaults>
</compile_context>

<pallas_src>
import functools

import jax
import jax.numpy as jnp
from jax.experimental import pallas as pl
from jax.experimental.pallas import tpu as pltpu

LANE = 128
CHUNK_ROWS = 256          # in-kernel accumulation chunk (sublane rows)
TILE_BYTES = 4 << 20      # per-input, per-pipeline-buffer DMA chunk target


def _round_up(v, m):
    return ((v + m - 1) // m) * m


def _choose_tiling(rows, itemsize):
    """Returns (tile_rows, virtual_blocks, num_splits)."""
    max_tile_rows = max(
        CHUNK_ROWS,
        (TILE_BYTES // (LANE * itemsize)) // CHUNK_ROWS * CHUNK_ROWS)
    if rows <= CHUNK_ROWS:
        # Tiny input: one block, no core split, no clamped duplicate reads.
        return _round_up(rows, 32), 1, 1
    # Target an even block count so the 2-way core split has no remainder.
    blocks = 2 * max(1, pl.cdiv(rows, 2 * max_tile_rows))
    tile_rows = _round_up(pl.cdiv(rows, blocks), CHUNK_ROWS)
    real_blocks = pl.cdiv(rows, tile_rows)
    # Sublane rounding may merge trailing blocks; keep an even virtual count.
    # The at-most-one extra virtual block is clamped + fully masked
    # (wasted HBM traffic <= 1/real_blocks, only in this rare corner).
    blocks = real_blocks + (real_blocks % 2)
    return tile_rows, blocks, 2


def _psnr_ssd_kernel(x_ref, y_ref, out_ref, acc_ref, *,
                     rows_valid, tile_rows, chunk_rows, blocks_per_half):
    """Accumulates the sum of squared diffs for one half of the data.

    Grid is (num_splits, blocks_per_half): outer axis = megacore split
    (parallel), inner axis = streaming reduction over row-blocks (arbitrary).
    """
    p = pl.program_id(0)
    i = pl.program_id(1)

    @pl.when(i == 0)
    def _():
        acc_ref[...] = jnp.zeros_like(acc_ref)

    base_row = (p * blocks_per_half + i) * tile_rows
    num_chunks = tile_rows // chunk_rows

    def chunk_update(r0, masked):
        xs = x_ref[pl.ds(r0, chunk_rows), :].astype(jnp.float32)
        ys = y_ref[pl.ds(r0, chunk_rows), :].astype(jnp.float32)
        d = xs - ys
        sq = d * d
        if masked:
            # Zero the contribution of rows past the logical end (partial last
            # block / the clamped duplicate block).  Mask is applied to sq
            # BEFORE accumulation, so OOB garbage (even NaN/Inf) is discarded.
            row_ids = (base_row + r0
                       + jax.lax.broadcasted_iota(jnp.int32, sq.shape, 0))
            sq = jnp.where(row_ids < rows_valid, sq, 0.0)
        # Pure VPU accumulation onto an (8, 128) vreg; no XLU / scalar work
        # in the steady-state loop.
        acc_ref[...] += jnp.sum(sq.reshape(chunk_rows // 8, 8, LANE), axis=0)

    def accumulate(masked):
        if num_chunks == 1:
            chunk_update(0, masked)
        else:
            @pl.loop(0, num_chunks)
            def _(c):
                chunk_update(pl.multiple_of(c * chunk_rows, chunk_rows), masked)

    # Boundary-only masking: interior blocks take the unmasked fast path.
    is_boundary = base_row + tile_rows > rows_valid

    @pl.when(jnp.logical_not(is_boundary))
    def _():
        accumulate(masked=False)

    @pl.when(is_boundary)
    def _():
        accumulate(masked=True)

    @pl.when(i == pl.num_programs(1) - 1)
    def _():
        # Single cross-lane (XLU) reduction per core, into this core's slot.
        out_ref[0, 0] = jnp.sum(acc_ref[...])


def psnr_loss(x, y):
    assert x.shape == y.shape, "x and y must have identical shapes"
    n = int(x.size)
    itemsize = x.dtype.itemsize

    # Flatten; for contiguous row-major inputs this is a free bitcast in XLA.
    xf = x.reshape(-1)
    yf = y.reshape(-1)

    rem = n % LANE
    if rem:
        # TODO(synk): ragged element counts fall back to a zero-pad copy of
        # both inputs (extra HBM read+write); a lane-masked 1-D tail path
        # would avoid it, but n % 128 != 0 is rare for image tensors.
        pad = LANE - rem
        xf = jnp.pad(xf, (0, pad))
        yf = jnp.pad(yf, (0, pad))
    rows = pl.cdiv(n, LANE)

    x2d = xf.reshape(rows, LANE)   # free reshape (row-major)
    y2d = yf.reshape(rows, LANE)

    tile_rows, blocks, num_splits = _choose_tiling(rows, itemsize)
    real_blocks = pl.cdiv(rows, tile_rows)
    half = blocks // num_splits
    chunk_rows = min(CHUNK_ROWS, tile_rows)

    def in_index(p, i):
        # Clamp so the (at most one) virtual block past the end re-reads a
        # valid block; its contribution is zeroed by the boundary row mask.
        return (jnp.minimum(p * half + i, real_blocks - 1), 0)

    # 2 inputs x 2 pipeline buffers x tile + slack for chunk temps / internals.
    tile_bytes = tile_rows * LANE * itemsize
    vmem_limit = int(min(max(16 << 20, 4 * tile_bytes + (8 << 20)), 64 << 20))

    cost = pl.CostEstimate(flops=3 * n, transcendentals=0,
                           bytes_accessed=2 * n * itemsize + 8)

    partials = pl.pallas_call(
        functools.partial(
            _psnr_ssd_kernel,
            rows_valid=rows,
            tile_rows=tile_rows,
            chunk_rows=chunk_rows,
            blocks_per_half=half,
        ),
        out_shape=jax.ShapeDtypeStruct((num_splits, 1), jnp.float32),
        grid_spec=pltpu.PrefetchScalarGridSpec(
            num_scalar_prefetch=0,
            grid=(num_splits, half),
            in_specs=[
                pl.BlockSpec((tile_rows, LANE), in_index),
                pl.BlockSpec((tile_rows, LANE), in_index),
            ],
            out_specs=pl.BlockSpec(
                (1, 1), lambda p, i: (p, 0), memory_space=pltpu.SMEM),
            scratch_shapes=[pltpu.VMEM((8, LANE), jnp.float32)],
        ),
        compiler_params=pltpu.CompilerParams(
            # NOTE(v7x): relies on the packer sharding the size-2 parallel
            # axis across both TensorCores; verify with xprof on real v7x.
            dimension_semantics=("parallel", "arbitrary"),
            vmem_limit_bytes=vmem_limit,
        ),
        cost_estimate=cost,
    )(x2d, y2d)

    ssd = jnp.sum(partials)
    mse = ssd / jnp.float32(n)
    # -10 * log10(1 / mse) == 10 * log10(mse);  mse == 0 -> -inf (matches torch)
    return 10.0 * jnp.log10(mse)


def _ref_psnr(x, y):
    mse = jnp.mean((x.astype(jnp.float32) - y.astype(jnp.float32)) ** 2)
    return -10.0 * jnp.log10(1.0 / mse)


if __name__ == "__main__":
    key = jax.random.PRNGKey(0)
    kx, ky = jax.random.split(key)

    # Primary check: NCHW f32, small shape (matches the PyTorch module usage).
    x = jax.random.uniform(kx, (2, 4, 16, 16), dtype=jnp.float32)
    y = jax.random.uniform(ky, (2, 4, 16, 16), dtype=jnp.float32)
    loss = psnr_loss(x, y)
    jax.block_until_ready(loss)
    assert jnp.allclose(loss, _ref_psnr(x, y), rtol=1e-5, atol=1e-6), (
        loss, _ref_psnr(x, y))

    # Ragged check: element count not a multiple of 128 (exercises masking).
    xr = jax.random.uniform(kx, (3, 3, 7, 5), dtype=jnp.float32)
    yr = jax.random.uniform(ky, (3, 3, 7, 5), dtype=jnp.float32)
    loss_r = psnr_loss(xr, yr)
    jax.block_until_ready(loss_r)
    assert jnp.allclose(loss_r, _ref_psnr(xr, yr), rtol=1e-5, atol=1e-6), (
        loss_r, _ref_psnr(xr, yr))

    # bf16 check: inputs streamed in native 16-bit dtype, cast in-kernel.
    xb = x.astype(jnp.bfloat16)
    yb = y.astype(jnp.bfloat16)
    loss_b = psnr_loss(xb, yb)
    jax.block_until_ready(loss_b)
    assert jnp.allclose(loss_b, _ref_psnr(xb, yb), rtol=1e-4, atol=1e-5), (
        loss_b, _ref_psnr(xb, yb))

    # Multi-block check: exercises the 2-way split + unmasked interior path
    # with the in-kernel chunk loop (rows divisible by tile -> no boundary).
    xm = jax.random.uniform(kx, (8, 4, 64, 128), dtype=jnp.float32)
    ym = jax.random.uniform(ky, (8, 4, 64, 128), dtype=jnp.float32)
    loss_m = psnr_loss(xm, ym)
    jax.block_until_ready(loss_m)
    assert jnp.allclose(loss_m, _ref_psnr(xm, ym), rtol=1e-5, atol=1e-5), (
        loss_m, _ref_psnr(xm, ym))

    # Multi-block boundary check: last block partial -> masked chunked path.
    xp = jax.random.uniform(kx, (5, 4, 64, 128), dtype=jnp.float32)
    yp = jax.random.uniform(ky, (5, 4, 64, 128), dtype=jnp.float32)
    loss_p = psnr_loss(xp, yp)
    jax.block_until_ready(loss_p)
    assert jnp.allclose(loss_p, _ref_psnr(xp, yp), rtol=1e-5, atol=1e-5), (
        loss_p, _ref_psnr(xp, yp))

    print("KERNEL_OK")
</pallas_src>

<mosaic_0001>
module attributes {stable_mosaic.version = 11 : i64} {
  func.func @_psnr_ssd_kernel(%arg0: i32, %arg1: i32, %arg2: memref<32x128xf32, #tpu.memory_space<vmem>>, %arg3: memref<32x128xf32, #tpu.memory_space<vmem>>, %arg4: memref<1x1xf32, #tpu.memory_space<smem>>, %arg5: memref<8x128xf32, #tpu.memory_space<vmem>>) attributes {dimension_semantics = [#tpu.dimension_semantics<parallel>, #tpu.dimension_semantics<arbitrary>], iteration_bounds = array<i64: 1, 1>, scalar_prefetch = 0 : i64, scratch_operands = 1 : i64, tpu.core_type = #tpu.core_type<tc>, window_params = [{transform_indices = @transform_0, window_bounds = array<i64: 32, 128>}, {transform_indices = @transform_1, window_bounds = array<i64: 32, 128>}, {transform_indices = @transform_2, window_bounds = array<i64: 1, 1>}]} {
    %c0_i32 = arith.constant 0 : i32
    %0 = arith.cmpi eq, %arg1, %c0_i32 : i32
    %1 = arith.extui %0 : i1 to i32
    %c0_i32_0 = arith.constant 0 : i32
    %2 = arith.cmpi ne, %1, %c0_i32_0 : i32
    scf.if %2 {
      %cst = arith.constant 0.000000e+00 : f32
      %16 = vector.broadcast %cst : f32 to vector<8x128xf32>
      %c0 = arith.constant 0 : index
      %c0_6 = arith.constant 0 : index
      %17 = vector.load %arg5[%c0, %c0_6] : memref<8x128xf32, #tpu.memory_space<vmem>>, vector<8x128xf32>
      tpu.vector_store %arg5[%c0, %c0_6], %16 {strides = array<i32>} : memref<8x128xf32, #tpu.memory_space<vmem>>, vector<8x128xf32>,
    } else {
    }
    %c1_i32 = arith.constant 1 : i32
    %3 = arith.muli %arg0, %c1_i32 : i32
    %4 = arith.addi %3, %arg1 : i32
    %c32_i32 = arith.constant 32 : i32
    %5 = arith.muli %4, %c32_i32 : i32
    %c32_i32_1 = arith.constant 32 : i32
    %6 = arith.addi %5, %c32_i32_1 : i32
    %c16_i32 = arith.constant 16 : i32
    %7 = arith.cmpi sgt, %6, %c16_i32 : i32
    %true = arith.constant true
    %8 = arith.xori %7, %true : i1
    %9 = arith.extui %8 : i1 to i32
    %c0_i32_2 = arith.constant 0 : i32
    %10 = arith.cmpi ne, %9, %c0_i32_2 : i32
    scf.if %10 {
      %c0 = arith.constant 0 : index
      %c0_6 = arith.constant 0 : index
      %16 = vector.load %arg2[%c0, %c0_6] : memref<32x128xf32, #tpu.memory_space<vmem>>, vector<32x128xf32>
      %c0_7 = arith.constant 0 : index
      %c0_8 = arith.constant 0 : index
      %17 = vector.load %arg3[%c0_7, %c0_8] : memref<32x128xf32, #tpu.memory_space<vmem>>, vector<32x128xf32>
      %18 = arith.subf %16, %17 : vector<32x128xf32>
      %19 = arith.mulf %18, %18 : vector<32x128xf32>
      %c0_9 = arith.constant 0 : index
      %c0_10 = arith.constant 0 : index
      %20 = vector.load %arg5[%c0_9, %c0_10] : memref<8x128xf32, #tpu.memory_space<vmem>>, vector<8x128xf32>
      %21 = vector.shape_cast %19 : vector<32x128xf32> to vector<4x8x128xf32>
      %cst = arith.constant dense<0.000000e+00> : vector<8x128xf32>
      %22 = vector.multi_reduction <add>, %21, %cst [0] : vector<4x8x128xf32> to vector<8x128xf32>
      %23 = arith.addf %20, %22 : vector<8x128xf32>
      %c0_11 = arith.constant 0 : index
      %c0_12 = arith.constant 0 : index
      %24 = vector.load %arg5[%c0_11, %c0_12] : memref<8x128xf32, #tpu.memory_space<vmem>>, vector<8x128xf32>
      tpu.vector_store %arg5[%c0_11, %c0_12], %23 {strides = array<i32>} : memref<8x128xf32, #tpu.memory_space<vmem>>, vector<8x128xf32>,
    } else {
    }
    %11 = arith.extui %7 : i1 to i32
    %c0_i32_3 = arith.constant 0 : i32
    %12 = arith.cmpi ne, %11, %c0_i32_3 : i32
    scf.if %12 {
      %c0 = arith.constant 0 : index
      %c0_6 = arith.constant 0 : index
      %16 = vector.load %arg2[%c0, %c0_6] : memref<32x128xf32, #tpu.memory_space<vmem>>, vector<32x128xf32>
      %c0_7 = arith.constant 0 : index
      %c0_8 = arith.constant 0 : index
      %17 = vector.load %arg3[%c0_7, %c0_8] : memref<32x128xf32, #tpu.memory_space<vmem>>, vector<32x128xf32>
      %18 = arith.subf %16, %17 : vector<32x128xf32>
      %19 = arith.mulf %18, %18 : vector<32x128xf32>
      %c0_i32_9 = arith.constant 0 : i32
      %20 = arith.addi %5, %c0_i32_9 : i32
      %21 = tpu.iota {dimensions = array<i32: 0>} : vector<32x128xi32>
      %22 = vector.broadcast %20 : i32 to vector<32x128xi32>
      %23 = arith.addi %22, %21 : vector<32x128xi32>
      %c16_i32_10 = arith.constant 16 : i32
      %24 = vector.broadcast %c16_i32_10 : i32 to vector<32x128xi32>
      %25 = arith.cmpi slt, %23, %24 : vector<32x128xi32>
      %cst = arith.constant 0.000000e+00 : f32
      %26 = vector.broadcast %cst : f32 to vector<32x128xf32>
      %27 = arith.select %25, %19, %26 : vector<32x128xi1>, vector<32x128xf32>
      %c0_11 = arith.constant 0 : index
      %c0_12 = arith.constant 0 : index
      %28 = vector.load %arg5[%c0_11, %c0_12] : memref<8x128xf32, #tpu.memory_space<vmem>>, vector<8x128xf32>
      %29 = vector.shape_cast %27 : vector<32x128xf32> to vector<4x8x128xf32>
      %cst_13 = arith.constant dense<0.000000e+00> : vector<8x128xf32>
      %30 = vector.multi_reduction <add>, %29, %cst_13 [0] : vector<4x8x128xf32> to vector<8x128xf32>
      %31 = arith.addf %28, %30 : vector<8x128xf32>
      %c0_14 = arith.constant 0 : index
      %c0_15 = arith.constant 0 : index
      %32 = vector.load %arg5[%c0_14, %c0_15] : memref<8x128xf32, #tpu.memory_space<vmem>>, vector<8x128xf32>
      tpu.vector_store %arg5[%c0_14, %c0_15], %31 {strides = array<i32>} : memref<8x128xf32, #tpu.memory_space<vmem>>, vector<8x128xf32>,
    } else {
    }
    %c0_i32_4 = arith.constant 0 : i32
    %13 = arith.cmpi eq, %arg1, %c0_i32_4 : i32
    %14 = arith.extui %13 : i1 to i32
    %c0_i32_5 = arith.constant 0 : i32
    %15 = arith.cmpi ne, %14, %c0_i32_5 : i32
    scf.if %15 {
      %c0 = arith.constant 0 : index
      %c0_6 = arith.constant 0 : index
      %16 = vector.load %arg5[%c0, %c0_6] : memref<8x128xf32, #tpu.memory_space<vmem>>, vector<8x128xf32>
      %17 = vector.shape_cast %16 : vector<8x128xf32> to vector<1x8x128xf32>
      %cst = arith.constant dense<0.000000e+00> : vector<1xf32>
      %18 = vector.multi_reduction <add>, %17, %cst [1, 2] : vector<1x8x128xf32> to vector<1xf32>
      %19 = vector.shape_cast %18 : vector<1xf32> to vector<1x1x1xf32>
      %20 = vector.extract %19[0, 0, 0] : f32 from vector<1x1x1xf32>
      %c0_7 = arith.constant 0 : index
      %c0_8 = arith.constant 0 : index
      %21 = memref.load %arg4[%c0_7, %c0_8] : memref<1x1xf32, #tpu.memory_space<smem>>
      memref.store %20, %arg4[%c0_7, %c0_8] : memref<1x1xf32, #tpu.memory_space<smem>>
    } else {
    }
    return
  }
  func.func @transform_0(%arg0: i32, %arg1: i32) -> (i32, i32) {
    %c1_i32 = arith.constant 1 : i32
    %0 = arith.muli %arg0, %c1_i32 : i32
    %1 = arith.addi %0, %arg1 : i32
    %c0_i32 = arith.constant 0 : i32
    %2 = arith.minsi %1, %c0_i32 : i32
    %c0_i32_0 = arith.constant 0 : i32
    %c0_i32_1 = arith.constant 0 : i32
    return %2, %c0_i32_0 : i32, i32
  }
  func.func @transform_1(%arg0: i32, %arg1: i32) -> (i32, i32) {
    %c1_i32 = arith.constant 1 : i32
    %0 = arith.muli %arg0, %c1_i32 : i32
    %1 = arith.addi %0, %arg1 : i32
    %c0_i32 = arith.constant 0 : i32
    %2 = arith.minsi %1, %c0_i32 : i32
    %c0_i32_0 = arith.constant 0 : i32
    %c0_i32_1 = arith.constant 0 : i32
    return %2, %c0_i32_0 : i32, i32
  }
  func.func @transform_2(%arg0: i32, %arg1: i32) -> (i32, i32) {
    %c0_i32 = arith.constant 0 : i32
    %c0_i32_0 = arith.constant 0 : i32
    return %arg0, %c0_i32 : i32, i32
  }
}

</mosaic_0001>

<llo_original>
// kernel: tpu_custom_call.1
$region0: #{tpu_custom_call.1}
  #allocation0 [shape = 'u32[]', space=smem, size = 0x4, offset = 0x4, fixed_abs, tag = 'smem constant byte address 0x4 - core index']
  #allocation1 [shape = 'u32[144,128]{1,0:T(1,128)}', space=vmem, size = 0x12000, scoped, tag = 'internal scratch']
  #allocation2 [shape = 'f32[8,128]{1,0:T(8,128)}', space=vmem, size = 0x1000, scoped, tag = 'scratch operand']
  %s0 = inlined_call_operand.hbm [shape: f32[16,128], index: 0, kind: input, shape index: {}]
  %s1 = inlined_call_operand.hbm [shape: f32[16,128], index: 1, kind: input, shape index: {}]
  %s2 = inlined_call_operand.hbm [shape: f32[1,1], index: 2, kind: output, shape index: {}]
  %s3 = sld [smem:[#allocation0]]
  $region42: #{tpu_custom_call.1} parent=0
    _
  %s5 = ssub.s32 1, %s3
  %s6 = scalar_select 0, %s5, %s3
  $region1: #{tpu_custom_call.1} parent=0
    #allocation3 [shape = 'u8[16384]{0}', space=vmem, size = 0x4000, scoped, tag = 'input window, operand 0, single buffered']
    #allocation4 [shape = 's32[1]{0}', space=sflag, size = 0x4, scoped, tag = 'scoped memory for tpu_custom_call.1']
    #allocation5 [shape = 's32[1]{0}', space=sflag, size = 0x4, scoped, tag = 'scoped memory for tpu_custom_call.1']
    #allocation6 [shape = 'u8[16384]{0}', space=vmem, size = 0x4000, scoped, tag = 'input window, operand 1, single buffered']
    #allocation7 [shape = 's32[1]{0}', space=sflag, size = 0x4, scoped, tag = 'scoped memory for tpu_custom_call.1']
    #allocation8 [shape = 'u8[512]{0}', space=smem, size = 0x200, scoped, tag = 'output window, operand 0, single buffered']
    %7 = vsyncpa [#allocation4], 0
    %8 = vsyncpa [#allocation7], 0
    %9 = vsyncpa [#allocation5], 0
    // Predicated region
    $region2: #{tpu_custom_call.1} parent=1 // pred_check
      _
    $region3: #{tpu_custom_call.1} parent=1 // pred_check_branch
      %11 = sbr.rel (0) target = $region5
    $region4: #{tpu_custom_call.1} parent=1 // pred_region
      %s12 = sadd.s32 0, 0
      %p13 = scmp.lt.s32.totalorder %s12, 0
      %s14 = scalar_select %p13, %s12, 0
      %s15 = smul.u32 4, %s14
      %s16 = ssub.s32 2, %s15
      %s17 = smul.u32 128, %s16
      %s19 = ssub.s32 512, %s17
      %20 = vsyncadd [#allocation4], %s19
      %p21 = scmp.ne.s32.totalorder 0, %s17
      %s22 = smul.addr %s15, 128
      %s23 = scalar_lea.hbm %s0, %s22
      %s24 = smul.u32 8, %s16
      %s25 = sshll.u32 [#allocation3], 4
      %s26 = int_to_ptr.vmem [resolvable:$true] %s25
      %s27 = sshll.u32 %s24, 4
      %31 = dma.hbm_to_vmem [thread:$0]  (%p21), %s23, %s27, %s26, [#allocation4], 128, 128, 8
    $region5: #{tpu_custom_call.1} parent=1 // pred_fallthru
      _
    // Predicated region
    $region6: #{tpu_custom_call.1} parent=1 // pred_check
      _
    $region7: #{tpu_custom_call.1} parent=1 // pred_check_branch
      %33 = sbr.rel (0) target = $region9
    $region8: #{tpu_custom_call.1} parent=1 // pred_region
      %s34 = sadd.s32 0, 0
      %p35 = scmp.lt.s32.totalorder %s34, 0
      %s36 = scalar_select %p35, %s34, 0
      %s37 = smul.u32 4, %s36
      %s38 = ssub.s32 2, %s37
      %s39 = smul.u32 128, %s38
      %s41 = ssub.s32 512, %s39
      %42 = vsyncadd [#allocation7], %s41
      %p43 = scmp.ne.s32.totalorder 0, %s39
      %s44 = smul.addr %s37, 128
      %s45 = scalar_lea.hbm %s1, %s44
      %s46 = smul.u32 8, %s38
      %s47 = sshll.u32 [#allocation6], 4
      %s48 = int_to_ptr.vmem [resolvable:$true] %s47
      %s49 = sshll.u32 %s46, 4
      %53 = dma.hbm_to_vmem [thread:$0]  (%p43), %s45, %s49, %s48, [#allocation7], 128, 128, 8
    $region9: #{tpu_custom_call.1} parent=1 // pred_fallthru
      _
    // Predicated region
    $region10: #{tpu_custom_call.1} parent=1 // pred_check
      _
    $region11: #{tpu_custom_call.1} parent=1 // pred_check_branch
      %55 = sbr.rel (0) target = $region13
    $region12: #{tpu_custom_call.1} parent=1 // pred_region
      %56 = dma.done [#allocation4], 512
    $region13: #{tpu_custom_call.1} parent=1 // pred_fallthru
      _
    // Predicated region
    $region14: #{tpu_custom_call.1} parent=1 // pred_check
      _
    $region15: #{tpu_custom_call.1} parent=1 // pred_check_branch
      %58 = sbr.rel (0) target = $region17
    $region16: #{tpu_custom_call.1} parent=1 // pred_region
      %59 = dma.done [#allocation7], 512
    $region17: #{tpu_custom_call.1} parent=1 // pred_fallthru
      _
    %s60 = sadd.s32 0, 0
    %p61 = scmp.lt.s32.totalorder %s60, 0
    %s62 = scalar_select %p61, %s60, 0
    %s63 = smul.u32 4, %s62
    %s64 = ssub.s32 2, %s63
    %s65 = smul.u32 128, %s64
    %s66 = sadd.s32 0, 0
    %p67 = scmp.lt.s32.totalorder %s66, 0
    %s68 = scalar_select %p67, %s66, 0
    %s69 = smul.u32 4, %s68
    %s70 = ssub.s32 2, %s69
    %s71 = smul.u32 128, %s70
    %p72 = scmp.eq.s32.totalorder 0, 0
    // Predicated region
    $region18: #{tpu_custom_call.1} parent=1 // pred_check
      %p73 = pneg %p72
    $region19: #{tpu_custom_call.1} parent=1 // pred_check_branch
      %75 = sbr.rel (%p73) target = $region21
    $region20: #{tpu_custom_call.1} parent=1 // pred_region
      %76 = vst [vmem:[#allocation2] sm:$0xff] 0.0
    $region21: #{tpu_custom_call.1} parent=1 // pred_fallthru
      _
    %s77 = sadd.s32 0, 0
    %s78 = smul.u32 %s77, 32
    %s79 = sadd.s32 %s78, 32
    %p80 = scmp.gt.s32.totalorder %s79, 16
    %p81 = scmp.le.s32.totalorder %s79, 16
    // Predicated region
    $region22: #{tpu_custom_call.1} parent=1 // pred_check
      %p82 = pneg %p81
    $region23: #{tpu_custom_call.1} parent=1 // pred_check_branch
      %84 = sbr.rel (%p82) target = $region25
    $region24: #{tpu_custom_call.1} parent=1 // pred_region
      %v85 = vld [vmem:[#allocation3] sm:$0xff]
      %v86 = vld [vmem:[#allocation3 + $0x8] sm:$0xff]
      %v87 = vld [vmem:[#allocation3 + $0x10] sm:$0xff]
      %v88 = vld [vmem:[#allocation3 + $0x18] sm:$0xff]
      %v89 = vld [vmem:[#allocation6] sm:$0xff]
      %v90 = vld [vmem:[#allocation6 + $0x8] sm:$0xff]
      %v91 = vld [vmem:[#allocation6 + $0x10] sm:$0xff]
      %v92 = vld [vmem:[#allocation6 + $0x18] sm:$0xff]
      %v93 = vsub.f32 %v85, %v89
      %v94 = vsub.f32 %v86, %v90
      %v95 = vsub.f32 %v87, %v91
      %v96 = vsub.f32 %v88, %v92
      %v97 = vmul.f32 %v93, %v93
      %v98 = vmul.f32 %v94, %v94
      %v99 = vmul.f32 %v95, %v95
      %v100 = vmul.f32 %v96, %v96
      %v101 = vld [vmem:[#allocation2] sm:$0xff]
      %v102 = vadd.f32 %v97, %v98
      %v103 = vadd.f32 %v102, %v99
      %v104 = vadd.f32 %v103, %v100
      %v105 = vadd.f32 %v101, %v104
      %106 = vst [vmem:[#allocation2] sm:$0xff] %v105
    $region25: #{tpu_custom_call.1} parent=1 // pred_fallthru
      _
    // Predicated region
    $region26: #{tpu_custom_call.1} parent=1 // pred_check
      %p107 = pneg %p80
    $region27: #{tpu_custom_call.1} parent=1 // pred_check_branch
      %109 = sbr.rel (%p107) target = $region29
    $region28: #{tpu_custom_call.1} parent=1 // pred_region
      %v110 = vld [vmem:[#allocation3] sm:$0xff]
      %v111 = vld [vmem:[#allocation3 + $0x8] sm:$0xff]
      %v112 = vld [vmem:[#allocation3 + $0x10] sm:$0xff]
      %v113 = vld [vmem:[#allocation3 + $0x18] sm:$0xff]
      %v114 = vld [vmem:[#allocation6] sm:$0xff]
      %v115 = vld [vmem:[#allocation6 + $0x8] sm:$0xff]
      %v116 = vld [vmem:[#allocation6 + $0x10] sm:$0xff]
      %v117 = vld [vmem:[#allocation6 + $0x18] sm:$0xff]
      %v118 = vsub.f32 %v110, %v114
      %v119 = vsub.f32 %v111, %v115
      %v120 = vsub.f32 %v112, %v116
      %v121 = vsub.f32 %v113, %v117
      %v122 = vmul.f32 %v118, %v118
      %v123 = vmul.f32 %v119, %v119
      %v124 = vmul.f32 %v120, %v120
      %v125 = vmul.f32 %v121, %v121
      %v126 = vlaneseq
      %v127 = vshrl.u32 %v126, 7
      %v128 = vadd.s32 %v127, 8
      %v129 = vadd.s32 %v127, 16
      %v130 = vadd.s32 %v127, 24
      %v131 = vstv %s78
      %v132 = vadd.s32 %v131, %v127
      %v133 = vadd.s32 %v131, %v128
      %v134 = vadd.s32 %v131, %v129
      %v135 = vadd.s32 %v131, %v130
      %vm136 = vcmp.lt.s32.totalorder %v132, 16
      %vm137 = vcmp.lt.s32.totalorder %v133, 16
      %vm138 = vcmp.lt.s32.totalorder %v134, 16
      %vm139 = vcmp.lt.s32.totalorder %v135, 16
      %v140 = vsel %vm136, %v122, 0.0
      %v141 = vsel %vm137, %v123, 0.0
      %v142 = vsel %vm138, %v124, 0.0
      %v143 = vsel %vm139, %v125, 0.0
      %v144 = vld [vmem:[#allocation2] sm:$0xff]
      %v145 = vadd.f32 %v140, %v141
      %v146 = vadd.f32 %v145, %v142
      %v147 = vadd.f32 %v146, %v143
      %v148 = vadd.f32 %v144, %v147
      %149 = vst [vmem:[#allocation2] sm:$0xff] %v148
    $region29: #{tpu_custom_call.1} parent=1 // pred_fallthru
      _
    // Predicated region
    $region30: #{tpu_custom_call.1} parent=1 // pred_check
      %p150 = pneg %p72
    $region31: #{tpu_custom_call.1} parent=1 // pred_check_branch
      %152 = sbr.rel (%p150) target = $region33
    $region32: #{tpu_custom_call.1} parent=1 // pred_region
      %v153 = vld [vmem:[#allocation2] sm:$0xff]
      %154 = vadd.xlane.f32.xlu0 %v153
      %v155 = vpop.xlane.xlu0 %154
      %v156 = vrot.slane %v155, 4
      %v157 = vadd.f32 %v155, %v156
      %v158 = vrot.slane %v157, 2
      %v159 = vadd.f32 %v157, %v158
      %v160 = vrot.slane %v159, 1
      %v161 = vadd.f32 %v159, %v160
      %s162 = vtos %v161
      %s163 = scalar_lea.smem [#allocation8], 0
      %164 = sst [smem:[%s163]] %s162
    $region33: #{tpu_custom_call.1} parent=1 // pred_fallthru
      _
    // Predicated region
    $region34: #{tpu_custom_call.1} parent=1 // pred_check
      _
    $region35: #{tpu_custom_call.1} parent=1 // pred_check_branch
      %166 = sbr.rel (0) target = $region37
    $region36: #{tpu_custom_call.1} parent=1 // pred_region
      %s168 = ssub.s32 16, 16
      %169 = vsyncadd [#allocation5], %s168
      %172 = dma.smem_to_hbm [#allocation8], 16, %s2, [#allocation5]
    $region37: #{tpu_custom_call.1} parent=1 // pred_fallthru
      _
    // Predicated region
    $region38: #{tpu_custom_call.1} parent=1 // pred_check
      _
    $region39: #{tpu_custom_call.1} parent=1 // pred_check_branch
      %174 = sbr.rel (0) target = $region41
    $region40: #{tpu_custom_call.1} parent=1 // pred_region
      %175 = dma.done [#allocation5], 16
    $region41: #{tpu_custom_call.1} parent=1 // pred_fallthru
      _
    %176 = sfence
    %177 = vsyncpa [#allocation4], 1
    %178 = vsyncpa [#allocation7], 1
    %179 = vsyncpa [#allocation5], 1

</llo_original>
